<compile_context>
chip_gen: v5e
topology: v5e:2x2
jax: 0.10.0
libtpu: 0.0.40
codegen_flags: <defaults>
</compile_context>

<pallas_src>
import jax
import jax.numpy as jnp
from jax.experimental import pallas as pl
from jax.experimental.pallas import tpu as pltpu

LANES = 128


def net_kernel(p_ref, x_ref, mu_ref, sg_ref):
    # p_ref: SMEM f32[14] = [w1(3), b1(3), w2 row0(3), w2 row1(3), b2(2)]
    # x_ref:  VMEM (tile, 128)  -- batch on lanes
    # mu_ref: VMEM (tile, 128)  -- mu
    # sg_ref: VMEM (tile, 128)  -- exp(log_sigma)
    x = x_ref[...]                                   # (tile, 128) f32

    # fc1 + tanh, unrolled over the 3 hidden units (scalar-broadcast FMAs).
    h0 = jnp.tanh(x * p_ref[0] + p_ref[3])
    h1 = jnp.tanh(x * p_ref[1] + p_ref[4])
    h2 = jnp.tanh(x * p_ref[2] + p_ref[5])

    # fc2: row 0 -> mu, row 1 -> log_sigma. Pure VALU, no lane reductions.
    mu = h0 * p_ref[6] + h1 * p_ref[7] + h2 * p_ref[8] + p_ref[12]
    ls = h0 * p_ref[9] + h1 * p_ref[10] + h2 * p_ref[11] + p_ref[13]

    mu_ref[...] = mu
    sg_ref[...] = jnp.exp(ls)


def _round_up(a, m):
    return pl.cdiv(a, m) * m


def net_forward(x, w1, b1, w2, b2, *, tile_rows=2048):
    """x: (B, 1). w1: (3, 1), b1: (3,), w2: (2, 3), b2: (2,) (PyTorch layouts).

    Returns (mu, sigma), each (B, 1) float32.
    """
    B = x.shape[0]
    rows = pl.cdiv(B, LANES)                  # lane-dense rows needed

    # Tile: multiple of 8 (sublane constraint), capped so the grid has >= 2
    # steps when there is enough work (keeps both v7x TensorCores busy).
    half_rows = max(8, _round_up(pl.cdiv(rows, 2), 8))
    tile = min(max(8, (tile_rows // 8) * 8), half_rows)
    rows_pad = _round_up(rows, tile)          # grid divides evenly
    b_pad = rows_pad * LANES

    # Repack batch onto the lane axis; skip the pad copy when not needed.
    x_flat = x.reshape(-1).astype(jnp.float32)
    if b_pad != B:
        x_flat = jnp.pad(x_flat, (0, b_pad - B))
    x2 = x_flat.reshape(rows_pad, LANES)

    # Flatten all parameters into one SMEM scalar table.
    params = jnp.concatenate(
        [w1.reshape(-1), b1.reshape(-1), w2.reshape(-1), b2.reshape(-1)]
    ).astype(jnp.float32)                     # (14,)

    mu_out, sg_out = pl.pallas_call(
        net_kernel,
        out_shape=(
            jax.ShapeDtypeStruct((rows_pad, LANES), jnp.float32),
            jax.ShapeDtypeStruct((rows_pad, LANES), jnp.float32),
        ),
        grid=(rows_pad // tile,),
        in_specs=[
            pl.BlockSpec(memory_space=pltpu.MemorySpace.SMEM),   # params (whole)
            pl.BlockSpec((tile, LANES), lambda i: (i, 0)),       # x tile
        ],
        out_specs=(
            pl.BlockSpec((tile, LANES), lambda i: (i, 0)),       # mu tile
            pl.BlockSpec((tile, LANES), lambda i: (i, 0)),       # sigma tile
        ),
        compiler_params=pltpu.CompilerParams(
            dimension_semantics=("parallel",)),
    )(params, x2)

    # Undo the lane-dense packing; contiguous prefix slice only (no strided
    # column slices -> no extra HBM pass).
    mu = mu_out.reshape(-1)[:B].reshape(B, 1)
    sigma = sg_out.reshape(-1)[:B].reshape(B, 1)
    return mu, sigma


if __name__ == "__main__":
    key = jax.random.PRNGKey(0)
    kx, k1, k2, k3, k4, kx2 = jax.random.split(key, 6)

    # Deterministic parameter init (shapes from nn.Linear(1,3) / nn.Linear(3,2)).
    w1 = jax.random.uniform(k1, (3, 1), minval=-1.0, maxval=1.0, dtype=jnp.float32)
    b1 = jax.random.uniform(k2, (3,), minval=-1.0, maxval=1.0, dtype=jnp.float32)
    w2 = jax.random.uniform(k3, (2, 3), minval=-0.5, maxval=0.5, dtype=jnp.float32)
    b2 = jax.random.uniform(k4, (2,), minval=-0.5, maxval=0.5, dtype=jnp.float32)

    def reference(xin):
        h = jnp.tanh(xin @ w1.T + b1)
        o = h @ w2.T + b2
        return o[:, 0:1], jnp.exp(o[:, 1:2])

    # Small-batch check (single block, padded tail).
    B = 8
    x = jax.random.normal(kx, (B, 1), dtype=jnp.float32)
    mu, sigma = net_forward(x, w1, b1, w2, b2)
    jax.block_until_ready((mu, sigma))
    mu_r, sg_r = reference(x)
    assert mu.shape == (B, 1) and sigma.shape == (B, 1)
    assert jnp.allclose(mu, mu_r, atol=1e-5, rtol=1e-5)
    assert jnp.allclose(sigma, sg_r, atol=1e-5, rtol=1e-5)

    # Exercise the tiled (multi-block) grid path + batch padding + tile clamp
    # (tile_rows=12 is not a multiple of 8; wrapper clamps it to 8).
    B2 = 3000
    x_big = jax.random.normal(kx2, (B2, 1), dtype=jnp.float32)
    mu2, sigma2 = net_forward(x_big, w1, b1, w2, b2, tile_rows=12)
    jax.block_until_ready((mu2, sigma2))
    mu2_r, sg2_r = reference(x_big)
    assert jnp.allclose(mu2, mu2_r, atol=1e-5, rtol=1e-5)
    assert jnp.allclose(sigma2, sg2_r, atol=1e-5, rtol=1e-5)

    # Default large-tile path (still multi-step capped grid).
    mu3, sigma3 = net_forward(x_big, w1, b1, w2, b2)
    jax.block_until_ready((mu3, sigma3))
    assert jnp.allclose(mu3, mu2_r, atol=1e-5, rtol=1e-5)
    assert jnp.allclose(sigma3, sg2_r, atol=1e-5, rtol=1e-5)

    print("KERNEL_OK")
</pallas_src>

<mosaic_0001>
module attributes {stable_mosaic.version = 11 : i64} {
  func.func @net_kernel(%arg0: i32, %arg1: memref<14xf32, #tpu.memory_space<smem>>, %arg2: memref<8x128xf32, #tpu.memory_space<vmem>>, %arg3: memref<8x128xf32, #tpu.memory_space<vmem>>, %arg4: memref<8x128xf32, #tpu.memory_space<vmem>>) attributes {dimension_semantics = [#tpu.dimension_semantics<parallel>], iteration_bounds = array<i64: 1>, scalar_prefetch = 0 : i64, scratch_operands = 0 : i64, tpu.core_type = #tpu.core_type<tc>, window_params = [{transform_indices = @transform_0, window_bounds = array<i64: 14>}, {transform_indices = @transform_1, window_bounds = array<i64: 8, 128>}, {transform_indices = @transform_2, window_bounds = array<i64: 8, 128>}, {transform_indices = @transform_3, window_bounds = array<i64: 8, 128>}]} {
    %c0 = arith.constant 0 : index
    %c0_0 = arith.constant 0 : index
    %0 = vector.load %arg2[%c0, %c0_0] : memref<8x128xf32, #tpu.memory_space<vmem>>, vector<8x128xf32>
    %c0_1 = arith.constant 0 : index
    %1 = memref.load %arg1[%c0_1] : memref<14xf32, #tpu.memory_space<smem>>
    %2 = vector.broadcast %1 : f32 to vector<8x128xf32>
    %3 = arith.mulf %0, %2 : vector<8x128xf32>
    %c3 = arith.constant 3 : index
    %4 = memref.load %arg1[%c3] : memref<14xf32, #tpu.memory_space<smem>>
    %5 = vector.broadcast %4 : f32 to vector<8x128xf32>
    %6 = arith.addf %3, %5 : vector<8x128xf32>
    %7 = math.tanh %6 : vector<8x128xf32>
    %c1 = arith.constant 1 : index
    %8 = memref.load %arg1[%c1] : memref<14xf32, #tpu.memory_space<smem>>
    %9 = vector.broadcast %8 : f32 to vector<8x128xf32>
    %10 = arith.mulf %0, %9 : vector<8x128xf32>
    %c4 = arith.constant 4 : index
    %11 = memref.load %arg1[%c4] : memref<14xf32, #tpu.memory_space<smem>>
    %12 = vector.broadcast %11 : f32 to vector<8x128xf32>
    %13 = arith.addf %10, %12 : vector<8x128xf32>
    %14 = math.tanh %13 : vector<8x128xf32>
    %c2 = arith.constant 2 : index
    %15 = memref.load %arg1[%c2] : memref<14xf32, #tpu.memory_space<smem>>
    %16 = vector.broadcast %15 : f32 to vector<8x128xf32>
    %17 = arith.mulf %0, %16 : vector<8x128xf32>
    %c5 = arith.constant 5 : index
    %18 = memref.load %arg1[%c5] : memref<14xf32, #tpu.memory_space<smem>>
    %19 = vector.broadcast %18 : f32 to vector<8x128xf32>
    %20 = arith.addf %17, %19 : vector<8x128xf32>
    %21 = math.tanh %20 : vector<8x128xf32>
    %c6 = arith.constant 6 : index
    %22 = memref.load %arg1[%c6] : memref<14xf32, #tpu.memory_space<smem>>
    %23 = vector.broadcast %22 : f32 to vector<8x128xf32>
    %24 = arith.mulf %7, %23 : vector<8x128xf32>
    %c7 = arith.constant 7 : index
    %25 = memref.load %arg1[%c7] : memref<14xf32, #tpu.memory_space<smem>>
    %26 = vector.broadcast %25 : f32 to vector<8x128xf32>
    %27 = arith.mulf %14, %26 : vector<8x128xf32>
    %28 = arith.addf %24, %27 : vector<8x128xf32>
    %c8 = arith.constant 8 : index
    %29 = memref.load %arg1[%c8] : memref<14xf32, #tpu.memory_space<smem>>
    %30 = vector.broadcast %29 : f32 to vector<8x128xf32>
    %31 = arith.mulf %21, %30 : vector<8x128xf32>
    %32 = arith.addf %28, %31 : vector<8x128xf32>
    %c12 = arith.constant 12 : index
    %33 = memref.load %arg1[%c12] : memref<14xf32, #tpu.memory_space<smem>>
    %34 = vector.broadcast %33 : f32 to vector<8x128xf32>
    %35 = arith.addf %32, %34 : vector<8x128xf32>
    %c9 = arith.constant 9 : index
    %36 = memref.load %arg1[%c9] : memref<14xf32, #tpu.memory_space<smem>>
    %37 = vector.broadcast %36 : f32 to vector<8x128xf32>
    %38 = arith.mulf %7, %37 : vector<8x128xf32>
    %c10 = arith.constant 10 : index
    %39 = memref.load %arg1[%c10] : memref<14xf32, #tpu.memory_space<smem>>
    %40 = vector.broadcast %39 : f32 to vector<8x128xf32>
    %41 = arith.mulf %14, %40 : vector<8x128xf32>
    %42 = arith.addf %38, %41 : vector<8x128xf32>
    %c11 = arith.constant 11 : index
    %43 = memref.load %arg1[%c11] : memref<14xf32, #tpu.memory_space<smem>>
    %44 = vector.broadcast %43 : f32 to vector<8x128xf32>
    %45 = arith.mulf %21, %44 : vector<8x128xf32>
    %46 = arith.addf %42, %45 : vector<8x128xf32>
    %c13 = arith.constant 13 : index
    %47 = memref.load %arg1[%c13] : memref<14xf32, #tpu.memory_space<smem>>
    %48 = vector.broadcast %47 : f32 to vector<8x128xf32>
    %49 = arith.addf %46, %48 : vector<8x128xf32>
    %c0_2 = arith.constant 0 : index
    %c0_3 = arith.constant 0 : index
    %50 = vector.load %arg3[%c0_2, %c0_3] : memref<8x128xf32, #tpu.memory_space<vmem>>, vector<8x128xf32>
    tpu.vector_store %arg3[%c0_2, %c0_3], %35 {strides = array<i32>} : memref<8x128xf32, #tpu.memory_space<vmem>>, vector<8x128xf32>,
    %51 = math.exp %49 : vector<8x128xf32>
    %c0_4 = arith.constant 0 : index
    %c0_5 = arith.constant 0 : index
    %52 = vector.load %arg4[%c0_4, %c0_5] : memref<8x128xf32, #tpu.memory_space<vmem>>, vector<8x128xf32>
    tpu.vector_store %arg4[%c0_4, %c0_5], %51 {strides = array<i32>} : memref<8x128xf32, #tpu.memory_space<vmem>>, vector<8x128xf32>,
    return
  }
  func.func @transform_0(%arg0: i32) -> i32 {
    %c0_i32 = arith.constant 0 : i32
    %c0_i32_0 = arith.constant 0 : i32
    return %c0_i32 : i32
  }
  func.func @transform_1(%arg0: i32) -> (i32, i32) {
    %c0_i32 = arith.constant 0 : i32
    %c0_i32_0 = arith.constant 0 : i32
    return %arg0, %c0_i32 : i32, i32
  }
  func.func @transform_2(%arg0: i32) -> (i32, i32) {
    %c0_i32 = arith.constant 0 : i32
    %c0_i32_0 = arith.constant 0 : i32
    return %arg0, %c0_i32 : i32, i32
  }
  func.func @transform_3(%arg0: i32) -> (i32, i32) {
    %c0_i32 = arith.constant 0 : i32
    %c0_i32_0 = arith.constant 0 : i32
    return %arg0, %c0_i32 : i32, i32
  }
}

</mosaic_0001>

<llo_original>
// kernel: tpu_custom_call.1
$region0: #{tpu_custom_call.1}
  #allocation0 [shape = 'u32[]', space=smem, size = 0x4, offset = 0x4, fixed_abs, tag = 'smem constant byte address 0x4 - core index']
  #allocation1 [shape = 'u32[72,128]{1,0:T(1,128)}', space=vmem, size = 0x9000, scoped, tag = 'internal scratch']
  %s0 = inlined_call_operand.hbm [shape: f32[14], index: 0, kind: input, shape index: {}]
  %s1 = inlined_call_operand.hbm [shape: f32[8,128], index: 1, kind: input, shape index: {}]
  %s2 = inlined_call_operand.hbm [shape: f32[8,128], index: 2, kind: output, shape index: {0}]
  %s3 = inlined_call_operand.hbm [shape: f32[8,128], index: 3, kind: output, shape index: {1}]
  %4 = xla_tuple %s2, %s3
  %s5 = sld [smem:[#allocation0]]
  $region34: #{tpu_custom_call.1} parent=0
    _
  %s7 = ssub.s32 1, %s5
  %s8 = scalar_select 0, %s7, %s5
  $region1: #{tpu_custom_call.1} parent=0
    #allocation2 [shape = 'u8[512]{0}', space=smem, size = 0x200, scoped, tag = 'input window, operand 0, single buffered']
    #allocation3 [shape = 's32[1]{0}', space=sflag, size = 0x4, scoped, tag = 'scoped memory for tpu_custom_call.1']
    #allocation4 [shape = 's32[1]{0}', space=sflag, size = 0x4, scoped, tag = 'scoped memory for tpu_custom_call.1']
    #allocation5 [shape = 's32[1]{0}', space=sflag, size = 0x4, scoped, tag = 'scoped memory for tpu_custom_call.1']
    #allocation6 [shape = 'u8[4096]{0}', space=vmem, size = 0x1000, scoped, tag = 'input window, operand 1, single buffered']
    #allocation7 [shape = 'u8[4096]{0}', space=vmem, size = 0x1000, scoped, tag = 'output window, operand 0, single buffered']
    #allocation8 [shape = 'u8[4096]{0}', space=vmem, size = 0x1000, scoped, tag = 'output window, operand 1, single buffered']
    #allocation9 [shape = 's32[1]{0}', space=sflag, size = 0x4, scoped, tag = 'scoped memory for tpu_custom_call.1']
    %9 = vsyncpa [#allocation5], 0
    %10 = vsyncpa [#allocation3], 0
    %11 = vsyncpa [#allocation4], 0
    %12 = vsyncpa [#allocation9], 0
    // Predicated region
    $region2: #{tpu_custom_call.1} parent=1 // pred_check
      _
    $region3: #{tpu_custom_call.1} parent=1 // pred_check_branch
      %14 = sbr.rel (0) target = $region5
    $region4: #{tpu_custom_call.1} parent=1 // pred_region
      %16 = vsyncadd [#allocation5], 0
      %s18 = sshll.u32 %s0, 4
      %s19 = int_to_ptr.hbm [resolvable:$true] %s18
      %21 = dma.hbm_to_smem %s19, 16, [#allocation2], [#allocation5]
    $region5: #{tpu_custom_call.1} parent=1 // pred_fallthru
      _
    // Predicated region
    $region6: #{tpu_custom_call.1} parent=1 // pred_check
      _
    $region7: #{tpu_custom_call.1} parent=1 // pred_check_branch
      %23 = sbr.rel (0) target = $region9
    $region8: #{tpu_custom_call.1} parent=1 // pred_region
      %25 = vsyncadd [#allocation3], 0
      %s27 = sshll.u32 %s1, 4
      %s28 = int_to_ptr.hbm [resolvable:$true] %s27
      %s29 = sshll.u32 [#allocation6], 4
      %s30 = int_to_ptr.vmem [resolvable:$true] %s29
      %32 = dma.hbm_to_vmem [thread:$0]  %s28, 128, %s30, [#allocation3]
    $region9: #{tpu_custom_call.1} parent=1 // pred_fallthru
      _
    // Predicated region
    $region10: #{tpu_custom_call.1} parent=1 // pred_check
      _
    $region11: #{tpu_custom_call.1} parent=1 // pred_check_branch
      %34 = sbr.rel (0) target = $region13
    $region12: #{tpu_custom_call.1} parent=1 // pred_region
      %36 = dma.done [#allocation5], 16
    $region13: #{tpu_custom_call.1} parent=1 // pred_fallthru
      _
    // Predicated region
    $region14: #{tpu_custom_call.1} parent=1 // pred_check
      _
    $region15: #{tpu_custom_call.1} parent=1 // pred_check_branch
      %38 = sbr.rel (0) target = $region17
    $region16: #{tpu_custom_call.1} parent=1 // pred_region
      %40 = dma.done [#allocation3], 128
    $region17: #{tpu_custom_call.1} parent=1 // pred_fallthru
      _
    %41 = sfence
    %v42 = vld [vmem:[#allocation6] sm:$0xff]
    %s43 = sld [smem:[#allocation2]]
    %v44 = vstv %s43
    %v45 = vmul.f32 %v42, %v44
    %s46 = sld [smem:[#allocation2 + $0x3]]
    %v47 = vstv %s46
    %v48 = vadd.f32 %v45, %v47
    %v49 = vtanh.pop %v48
    %s50 = sld [smem:[#allocation2 + $0x1]]
    %v51 = vstv %s50
    %v52 = vmul.f32 %v42, %v51
    %s53 = sld [smem:[#allocation2 + $0x4]]
    %v54 = vstv %s53
    %v55 = vadd.f32 %v52, %v54
    %v56 = vtanh.pop %v55
    %s57 = sld [smem:[#allocation2 + $0x2]]
    %v58 = vstv %s57
    %v59 = vmul.f32 %v42, %v58
    %s60 = sld [smem:[#allocation2 + $0x5]]
    %v61 = vstv %s60
    %v62 = vadd.f32 %v59, %v61
    %v63 = vtanh.pop %v62
    %s64 = sld [smem:[#allocation2 + $0x6]]
    %v65 = vstv %s64
    %v66 = vmul.f32 %v49, %v65
    %s67 = sld [smem:[#allocation2 + $0x7]]
    %v68 = vstv %s67
    %v69 = vmul.f32 %v56, %v68
    %v70 = vadd.f32 %v66, %v69
    %s71 = sld [smem:[#allocation2 + $0x8]]
    %v72 = vstv %s71
    %v73 = vmul.f32 %v63, %v72
    %v74 = vadd.f32 %v70, %v73
    %s75 = sld [smem:[#allocation2 + $0xc]]
    %v76 = vstv %s75
    %v77 = vadd.f32 %v74, %v76
    %s78 = sld [smem:[#allocation2 + $0x9]]
    %v79 = vstv %s78
    %v80 = vmul.f32 %v49, %v79
    %s81 = sld [smem:[#allocation2 + $0xa]]
    %v82 = vstv %s81
    %v83 = vmul.f32 %v56, %v82
    %v84 = vadd.f32 %v80, %v83
    %s85 = sld [smem:[#allocation2 + $0xb]]
    %v86 = vstv %s85
    %v87 = vmul.f32 %v63, %v86
    %v88 = vadd.f32 %v84, %v87
    %s89 = sld [smem:[#allocation2 + $0xd]]
    %v90 = vstv %s89
    %v91 = vadd.f32 %v88, %v90
    %92 = vst [vmem:[#allocation7] sm:$0xff] %v77
    %v93 = vmul.f32 %v91, 1.442695
    %v94 = vpow.pop %v93
    %95 = vst [vmem:[#allocation8] sm:$0xff] %v94
    // Predicated region
    $region18: #{tpu_custom_call.1} parent=1 // pred_check
      _
    $region19: #{tpu_custom_call.1} parent=1 // pred_check_branch
      %97 = sbr.rel (0) target = $region21
    $region20: #{tpu_custom_call.1} parent=1 // pred_region
      %99 = vsyncadd [#allocation4], 0
      %s101 = sshll.u32 [#allocation7], 4
      %s102 = int_to_ptr.vmem [resolvable:$true] %s101
      %s103 = sshll.u32 %s2, 4
      %s104 = int_to_ptr.hbm [resolvable:$true] %s103
      %106 = dma.vmem_to_hbm [thread:$0]  %s102, 128, %s104, [#allocation4]
    $region21: #{tpu_custom_call.1} parent=1 // pred_fallthru
      _
    // Predicated region
    $region22: #{tpu_custom_call.1} parent=1 // pred_check
      _
    $region23: #{tpu_custom_call.1} parent=1 // pred_check_branch
      %108 = sbr.rel (0) target = $region25
    $region24: #{tpu_custom_call.1} parent=1 // pred_region
      %110 = vsyncadd [#allocation9], 0
      %s112 = sshll.u32 [#allocation8], 4
      %s113 = int_to_ptr.vmem [resolvable:$true] %s112
      %s114 = sshll.u32 %s3, 4
      %s115 = int_to_ptr.hbm [resolvable:$true] %s114
      %117 = dma.vmem_to_hbm [thread:$0]  %s113, 128, %s115, [#allocation9]
    $region25: #{tpu_custom_call.1} parent=1 // pred_fallthru
      _
    // Predicated region
    $region26: #{tpu_custom_call.1} parent=1 // pred_check
      _
    $region27: #{tpu_custom_call.1} parent=1 // pred_check_branch
      %119 = sbr.rel (0) target = $region29
    $region28: #{tpu_custom_call.1} parent=1 // pred_region
      %121 = dma.done [#allocation4], 128
    $region29: #{tpu_custom_call.1} parent=1 // pred_fallthru
      _
    // Predicated region
    $region30: #{tpu_custom_call.1} parent=1 // pred_check
      _
    $region31: #{tpu_custom_call.1} parent=1 // pred_check_branch
      %123 = sbr.rel (0) target = $region33
    $region32: #{tpu_custom_call.1} parent=1 // pred_region
      %125 = dma.done [#allocation9], 128
    $region33: #{tpu_custom_call.1} parent=1 // pred_fallthru
      _
    %126 = vsyncpa [#allocation3], 1
    %127 = vsyncpa [#allocation4], 1
    %128 = vsyncpa [#allocation9], 1
    %129 = vsyncpa [#allocation5], 1

</llo_original>
